<compile_context>
chip_gen: v5e
topology: v5e:2x2
jax: 0.10.0
libtpu: 0.0.40
codegen_flags: <defaults>
</compile_context>

<pallas_src>
import math
import functools

import jax
import jax.numpy as jnp
from jax import lax
from jax.experimental import pallas as pl
from jax.experimental.pallas import tpu as pltpu


def _backpack_weight_kernel(x_ref, w_ref, b_ref, out_ref, q_scratch, k_scratch, *,
                            hd, block_q, exp_dtype, approx_softmax_recip):
    # One grid step per (batch b, sense h, query-row tile qt):
    #   x_ref     : (1, S, D)        batch element, compute_dtype (resident over h, qt)
    #   w_ref     : (1, D, 2*hd)     fused [q | k] projection for sense h (scale folded into q)
    #   b_ref     : (1, 1, 2*hd)     fused [q | k] bias, f32 (scale folded into q half)
    #   out_ref   : (1, 1, block_q, S) softmax(causal(q @ k^T)) rows for this q tile
    #   q_scratch : (S, hd)          per-(b, h) q projection, persists across qt
    #   k_scratch : (S, hd)          per-(b, h) k projection, persists across qt
    qt = pl.program_id(2)
    S = x_ref.shape[1]

    # Projection runs once per (b, h) on the first query tile; the fused
    # (S, D) @ (D, 2*hd) dot doubles the MXU N width vs separate q/k dots.
    @pl.when(qt == 0)
    def _():
        qk = jnp.dot(x_ref[0], w_ref[0],
                     preferred_element_type=jnp.float32) + b_ref[0]      # (S, 2*hd) f32
        q_scratch[...] = qk[:, :hd].astype(q_scratch.dtype)
        k_scratch[...] = qk[:, hd:].astype(k_scratch.dtype)

    row0 = pl.multiple_of(qt * block_q, block_q)
    q = q_scratch[pl.ds(row0, block_q), :]                               # (block_q, hd)
    k = k_scratch[...]                                                   # (S, hd)

    # scores[t, s] = sum_e q[t, e] * k[s, e]; contraction over the last dim of
    # both operands -> no materialized transpose in the kernel body.
    scores = lax.dot_general(
        q, k, dimension_numbers=(((1,), (1,)), ((), ())),
        preferred_element_type=jnp.float32)                              # (block_q, S)

    t_idx = row0 + lax.broadcasted_iota(jnp.int32, (block_q, S), 0)      # query position
    s_idx = lax.broadcasted_iota(jnp.int32, (block_q, S), 1)             # key position
    # Additive -10000 mask strictly above the diagonal (== scores + triu(-1e4, 1)).
    scores = jnp.where(s_idx > t_idx, scores - 10000.0, scores)

    # Row softmax; the divide goes to the EUP via the approximate reciprocal.
    m = jnp.max(scores, axis=-1, keepdims=True)
    z = scores - m
    if exp_dtype is not None:
        # bf16 exp is ~2x EUP throughput on v6e/v7x; do NOT enable on v5e.
        e = jnp.exp(z.astype(exp_dtype)).astype(jnp.float32)
    else:
        e = jnp.exp(z)
    denom = jnp.sum(e, axis=-1, keepdims=True)
    if approx_softmax_recip:
        probs = e * pl.reciprocal(denom, approx=True)
    else:
        probs = e / denom

    out_ref[0, 0] = probs.astype(out_ref.dtype)


def backpack_weight_network(x, weight, bias, *, num_senses,
                            compute_dtype=jnp.bfloat16, out_dtype=None,
                            block_q=None, exp_dtype=None,
                            approx_softmax_recip=True):
    """Fused BackpackWeightNetwork forward.

    x:      (B, S, D) activations.
    weight: (2*D, D)  c_attn weight in PyTorch nn.Linear layout (out_features, in_features).
    bias:   (2*D,)    c_attn bias.

    compute_dtype: MXU operand dtype (bf16 default fast path, f32 accumulation
                   always; pass jnp.float32 for strict accuracy).
    out_dtype:     defaults to x.dtype (module parity); pass jnp.bfloat16 to
                   halve the dominant (B, H, S, S) HBM writeback.
    block_q:       query-row tile (must divide S); auto-picked otherwise.
    exp_dtype:     optionally jnp.bfloat16 on v6e/v7x to halve EUP exp cost.
    approx_softmax_recip: EUP approximate reciprocal (rows may not sum to
                   exactly 1); set False for exact-softmax parity.

    Returns (B, num_senses, S, S) per-sense causal attention probabilities.
    """
    B, S, D = x.shape
    H = num_senses
    if D % num_senses != 0:
        raise ValueError(f"embed_dim {D} not divisible by num_senses {num_senses}")
    hd = D // num_senses
    out_dtype = x.dtype if out_dtype is None else out_dtype
    scale = 1.0 / math.sqrt(hd)

    # Query-row tile: biggest of {512, 256, 128} that divides S, else full S.
    # (For best writeback perf S should be a multiple of 128 -> lane-dense vst.)
    if block_q is None:
        block_q = S
        for cand in (512, 256, 128):
            if S % cand == 0:
                block_q = cand
                break
    if S % block_q != 0 or not (block_q == S or block_q % 8 == 0):
        raise ValueError(f"block_q={block_q} must divide S={S} and be a multiple of 8")
    n_qt = S // block_q

    # One-time parameter re-layout (fuses into the surrounding XLA graph):
    #   * transpose to x @ W layout, split q / k halves per sense,
    #   * fold the softmax scale into the q projection (weight + bias),
    #   * fuse per-sense q|k into one (D, 2*hd) slab for a wider MXU N,
    #   * cast operands to compute_dtype HERE so the kernel does no per-step casts.
    w_t = weight.T                                                        # (D, 2D)
    wq = (w_t[:, :D] * scale).reshape(D, H, hd)                           # (D, H, hd)
    wk = w_t[:, D:].reshape(D, H, hd)                                     # (D, H, hd)
    w_qk = jnp.concatenate([wq, wk], axis=-1)                             # (D, H, 2*hd)
    w_qk = w_qk.transpose(1, 0, 2).astype(compute_dtype)                  # (H, D, 2*hd)
    bq = (bias[:D].astype(jnp.float32) * scale).reshape(H, hd)
    bk = bias[D:].astype(jnp.float32).reshape(H, hd)
    b_qk = jnp.concatenate([bq, bk], axis=-1).reshape(H, 1, 2 * hd)       # (H, 1, 2*hd) f32
    x_c = x.astype(compute_dtype)

    kernel = functools.partial(
        _backpack_weight_kernel, hd=hd, block_q=block_q,
        exp_dtype=exp_dtype, approx_softmax_recip=approx_softmax_recip)

    # VMEM budget estimate (x block + w/b blocks + q/k scratch + out block
    # double-buffered + f32 temporaries) with headroom, capped for v7x's 64 MiB.
    comp_item = jnp.dtype(compute_dtype).itemsize
    out_item = jnp.dtype(out_dtype).itemsize
    vmem_est = (2 * S * D * comp_item
                + 4 * D * 2 * hd * comp_item
                + 2 * 2 * S * hd * comp_item
                + 2 * block_q * S * out_item
                + 6 * block_q * S * 4
                + (1 << 20))
    vmem_limit = int(min(max(2 * vmem_est, 32 << 20), 64 << 20))

    # Prefer sharding the batch axis across v7x's 2 TensorCores so each core
    # keeps x-block reuse over the sense axis; fall back to H when B == 1.
    if B >= 2:
        dims = ("parallel", "arbitrary", "arbitrary")
    else:
        dims = ("arbitrary", "parallel", "arbitrary")

    cost = pl.CostEstimate(
        flops=int(2 * B * H * (S * D * 2 * hd + S * S * hd)),
        transcendentals=int(B * H * S * S),
        bytes_accessed=int(x_c.size * comp_item + w_qk.size * comp_item
                           + b_qk.size * 4 + B * H * S * S * out_item),
    )

    return pl.pallas_call(
        kernel,
        out_shape=jax.ShapeDtypeStruct((B, H, S, S), out_dtype),
        grid_spec=pltpu.PrefetchScalarGridSpec(
            num_scalar_prefetch=0,
            grid=(B, H, n_qt),
            in_specs=[
                pl.BlockSpec((1, S, D), lambda b, h, qt: (b, 0, 0)),        # x (resident over h, qt)
                pl.BlockSpec((1, D, 2 * hd), lambda b, h, qt: (h, 0, 0)),   # fused q|k weights, sense h
                pl.BlockSpec((1, 1, 2 * hd), lambda b, h, qt: (h, 0, 0)),   # fused q|k bias, sense h
            ],
            out_specs=pl.BlockSpec((1, 1, block_q, S),
                                   lambda b, h, qt: (b, h, qt, 0)),
            scratch_shapes=[
                pltpu.VMEM((S, hd), compute_dtype),   # q for this (b, h)
                pltpu.VMEM((S, hd), compute_dtype),   # k for this (b, h)
            ],
        ),
        compiler_params=pltpu.CompilerParams(
            dimension_semantics=dims,
            vmem_limit_bytes=vmem_limit,
        ),
        cost_estimate=cost,
    )(x_c, w_qk, b_qk)


def _reference(x, weight, bias, *, num_senses):
    """Plain-JAX reference mirroring the PyTorch forward, for validation."""
    B, S, D = x.shape
    hd = D // num_senses
    enc = jnp.einsum("bsd,ed->bse", x, weight) + bias        # nn.Linear: x @ W^T + b
    enc = enc.reshape(B, S, 2, num_senses, hd)
    q, k = enc[:, :, 0], enc[:, :, 1]                        # (B, S, H, hd)
    scale = 1.0 / math.sqrt(hd)
    scores = jnp.einsum("bthd,bshd->bhts", q, k * scale)     # (B, H, S, S)
    causal = jnp.triu(jnp.full((S, S), -10000.0, dtype=scores.dtype), 1)
    scores = scores + causal
    return jax.nn.softmax(scores, axis=-1)


if __name__ == "__main__":
    # Small shapes consistent with the module: batch=2, seq=8, hidden=32, 4 senses.
    B, S, D = 2, 8, 32
    NUM_SENSES = 4

    key = jax.random.PRNGKey(0)
    kx, kw, kb = jax.random.split(key, 3)
    x = jax.random.normal(kx, (B, S, D), dtype=jnp.float32)
    # c_attn parameters in PyTorch nn.Linear layout: weight (2D, D), bias (2D,).
    weight = jax.random.normal(kw, (2 * D, D), dtype=jnp.float32) * 0.02
    bias = jax.random.normal(kb, (2 * D,), dtype=jnp.float32) * 0.02

    ref = _reference(x, weight, bias, num_senses=NUM_SENSES)

    # Default fast path: bf16 MXU operands, f32 accumulation, f32 output (x.dtype).
    out = backpack_weight_network(x, weight, bias, num_senses=NUM_SENSES)
    out = jax.block_until_ready(out)
    assert out.shape == (B, NUM_SENSES, S, S)
    assert jnp.allclose(out, ref, atol=3e-2, rtol=3e-2), "bf16-operand kernel mismatch"

    # Strict-accuracy path: f32 operands + exact softmax divide.
    out_f32 = backpack_weight_network(
        x, weight, bias, num_senses=NUM_SENSES,
        compute_dtype=jnp.float32, approx_softmax_recip=False)
    out_f32 = jax.block_until_ready(out_f32)
    assert jnp.allclose(out_f32, ref, atol=1e-4, rtol=1e-4), "f32 kernel mismatch"

    # Writeback-optimized path: bf16 output halves the dominant HBM traffic.
    out_bf16 = backpack_weight_network(
        x, weight, bias, num_senses=NUM_SENSES, out_dtype=jnp.bfloat16)
    out_bf16 = jax.block_until_ready(out_bf16)
    assert out_bf16.dtype == jnp.bfloat16
    assert jnp.allclose(out_bf16.astype(jnp.float32), ref, atol=4e-2, rtol=4e-2), \
        "bf16-output kernel mismatch"

    print("KERNEL_OK")
</pallas_src>

<mosaic_0001>
module attributes {stable_mosaic.version = 11 : i64} {
  func.func @_backpack_weight_kernel(%arg0: i32, %arg1: i32, %arg2: i32, %arg3: memref<1x8x32xbf16, #tpu.memory_space<vmem>>, %arg4: memref<1x32x16xbf16, #tpu.memory_space<vmem>>, %arg5: memref<1x1x16xf32, #tpu.memory_space<vmem>>, %arg6: memref<1x1x8x8xf32, #tpu.memory_space<vmem>>, %arg7: memref<8x8xbf16, #tpu.memory_space<vmem>>, %arg8: memref<8x8xbf16, #tpu.memory_space<vmem>>) attributes {dimension_semantics = [#tpu.dimension_semantics<parallel>, #tpu.dimension_semantics<arbitrary>, #tpu.dimension_semantics<arbitrary>], iteration_bounds = array<i64: 2, 4, 1>, scalar_prefetch = 0 : i64, scratch_operands = 2 : i64, tpu.core_type = #tpu.core_type<tc>, window_params = [{transform_indices = @transform_0, window_bounds = array<i64: 1, 8, 32>}, {transform_indices = @transform_1, window_bounds = array<i64: 1, 32, 16>}, {transform_indices = @transform_2, window_bounds = array<i64: 1, 1, 16>}, {transform_indices = @transform_3, window_bounds = array<i64: 1, 1, 8, 8>}]} {
    %c0_i32 = arith.constant 0 : i32
    %0 = arith.cmpi eq, %arg2, %c0_i32 : i32
    %1 = arith.extui %0 : i1 to i32
    %c0_i32_0 = arith.constant 0 : i32
    %2 = arith.cmpi ne, %1, %c0_i32_0 : i32
    scf.if %2 {
      %c0_10 = arith.constant 0 : index
      %c0_11 = arith.constant 0 : index
      %c0_12 = arith.constant 0 : index
      %30 = vector.load %arg3[%c0_10, %c0_11, %c0_12] : memref<1x8x32xbf16, #tpu.memory_space<vmem>>, vector<1x8x32xbf16>
      %31 = vector.shape_cast %30 : vector<1x8x32xbf16> to vector<8x32xbf16>
      %c0_13 = arith.constant 0 : index
      %c0_14 = arith.constant 0 : index
      %c0_15 = arith.constant 0 : index
      %32 = vector.load %arg4[%c0_13, %c0_14, %c0_15] : memref<1x32x16xbf16, #tpu.memory_space<vmem>>, vector<1x32x16xbf16>
      %33 = vector.shape_cast %32 : vector<1x32x16xbf16> to vector<32x16xbf16>
      %cst_16 = arith.constant dense<0.000000e+00> : vector<8x16xf32>
      %34 = tpu.matmul %31, %33, %cst_16 {dimension_numbers = #tpu.dot_dimension_numbers<[1], [0], [0], [1], [0, 0, 1, 1], [], []>} : vector<8x32xbf16>, vector<32x16xbf16>, vector<8x16xf32> -> vector<8x16xf32>
      %c0_17 = arith.constant 0 : index
      %c0_18 = arith.constant 0 : index
      %c0_19 = arith.constant 0 : index
      %35 = vector.load %arg5[%c0_17, %c0_18, %c0_19] : memref<1x1x16xf32, #tpu.memory_space<vmem>>, vector<1x1x16xf32>
      %36 = vector.shape_cast %35 : vector<1x1x16xf32> to vector<1x16xf32>
      %37 = vector.broadcast %36 : vector<1x16xf32> to vector<8x16xf32>
      %38 = arith.addf %34, %37 : vector<8x16xf32>
      %39 = vector.extract_strided_slice %38 {offsets = [0, 0], sizes = [8, 8], strides = [1, 1]} : vector<8x16xf32> to vector<8x8xf32>
      %40 = arith.truncf %39 : vector<8x8xf32> to vector<8x8xbf16>
      %c0_20 = arith.constant 0 : index
      %c0_21 = arith.constant 0 : index
      %41 = vector.load %arg7[%c0_20, %c0_21] : memref<8x8xbf16, #tpu.memory_space<vmem>>, vector<8x8xbf16>
      tpu.vector_store %arg7[%c0_20, %c0_21], %40 {strides = array<i32>} : memref<8x8xbf16, #tpu.memory_space<vmem>>, vector<8x8xbf16>,
      %42 = vector.extract_strided_slice %38 {offsets = [0, 8], sizes = [8, 8], strides = [1, 1]} : vector<8x16xf32> to vector<8x8xf32>
      %43 = arith.truncf %42 : vector<8x8xf32> to vector<8x8xbf16>
      %c0_22 = arith.constant 0 : index
      %c0_23 = arith.constant 0 : index
      %44 = vector.load %arg8[%c0_22, %c0_23] : memref<8x8xbf16, #tpu.memory_space<vmem>>, vector<8x8xbf16>
      tpu.vector_store %arg8[%c0_22, %c0_23], %43 {strides = array<i32>} : memref<8x8xbf16, #tpu.memory_space<vmem>>, vector<8x8xbf16>,
    } else {
    }
    %c8_i32 = arith.constant 8 : i32
    %3 = arith.muli %arg2, %c8_i32 : i32
    %4 = tpu.assume_multiple %3, 8 : i32
    %5 = arith.index_cast %4 : i32 to index
    %c0 = arith.constant 0 : index
    %6 = vector.load %arg7[%5, %c0] : memref<8x8xbf16, #tpu.memory_space<vmem>>, vector<8x8xbf16>
    %c0_1 = arith.constant 0 : index
    %c0_2 = arith.constant 0 : index
    %7 = vector.load %arg8[%c0_1, %c0_2] : memref<8x8xbf16, #tpu.memory_space<vmem>>, vector<8x8xbf16>
    %cst = arith.constant dense<0.000000e+00> : vector<8x8xf32>
    %8 = tpu.matmul %6, %7, %cst {dimension_numbers = #tpu.dot_dimension_numbers<[1], [1], [0], [0], [0, 0, 1, 0], [], []>} : vector<8x8xbf16>, vector<8x8xbf16>, vector<8x8xf32> -> vector<8x8xf32>
    %9 = tpu.iota {dimensions = array<i32: 0>} : vector<8x8xi32>
    %10 = vector.broadcast %4 : i32 to vector<8x8xi32>
    %11 = arith.addi %10, %9 : vector<8x8xi32>
    %12 = tpu.iota {dimensions = array<i32: 1>} : vector<8x8xi32>
    %13 = arith.cmpi sgt, %12, %11 : vector<8x8xi32>
    %cst_3 = arith.constant 1.000000e+04 : f32
    %14 = vector.broadcast %cst_3 : f32 to vector<8x8xf32>
    %15 = arith.subf %8, %14 : vector<8x8xf32>
    %16 = arith.select %13, %15, %8 : vector<8x8xi1>, vector<8x8xf32>
    %cst_4 = arith.constant dense<0xFF800000> : vector<8xf32>
    %17 = vector.multi_reduction <maximumf>, %16, %cst_4 [1] : vector<8x8xf32> to vector<8xf32>
    %18 = vector.shape_cast %17 : vector<8xf32> to vector<8x1xf32>
    %19 = vector.broadcast %18 : vector<8x1xf32> to vector<8x8xf32>
    %20 = arith.subf %16, %19 : vector<8x8xf32>
    %21 = math.exp %20 : vector<8x8xf32>
    %cst_5 = arith.constant dense<0.000000e+00> : vector<8xf32>
    %22 = vector.multi_reduction <add>, %21, %cst_5 [1] : vector<8x8xf32> to vector<8xf32>
    %23 = vector.shape_cast %22 : vector<8xf32> to vector<8x1xf32>
    %24 = tpu.reciprocal %23 {approx = true} : vector<8x1xf32> -> vector<8x1xf32>
    %25 = vector.broadcast %24 : vector<8x1xf32> to vector<8x8xf32>
    %26 = arith.mulf %21, %25 : vector<8x8xf32>
    %c0_6 = arith.constant 0 : index
    %c0_7 = arith.constant 0 : index
    %c0_8 = arith.constant 0 : index
    %c0_9 = arith.constant 0 : index
    %27 = vector.load %arg6[%c0_6, %c0_7, %c0_8, %c0_9] : memref<1x1x8x8xf32, #tpu.memory_space<vmem>>, vector<1x1x8x8xf32>
    %28 = vector.shape_cast %27 : vector<1x1x8x8xf32> to vector<8x8xf32>
    %29 = vector.shape_cast %26 : vector<8x8xf32> to vector<1x1x8x8xf32>
    tpu.vector_store %arg6[%c0_6, %c0_7, %c0_8, %c0_9], %29 {strides = array<i32>} : memref<1x1x8x8xf32, #tpu.memory_space<vmem>>, vector<1x1x8x8xf32>,
    return
  }
  func.func @transform_0(%arg0: i32, %arg1: i32, %arg2: i32) -> (i32, i32, i32) {
    %c0_i32 = arith.constant 0 : i32
    %c0_i32_0 = arith.constant 0 : i32
    %c0_i32_1 = arith.constant 0 : i32
    return %arg0, %c0_i32, %c0_i32_0 : i32, i32, i32
  }
  func.func @transform_1(%arg0: i32, %arg1: i32, %arg2: i32) -> (i32, i32, i32) {
    %c0_i32 = arith.constant 0 : i32
    %c0_i32_0 = arith.constant 0 : i32
    %c0_i32_1 = arith.constant 0 : i32
    return %arg1, %c0_i32, %c0_i32_0 : i32, i32, i32
  }
  func.func @transform_2(%arg0: i32, %arg1: i32, %arg2: i32) -> (i32, i32, i32) {
    %c0_i32 = arith.constant 0 : i32
    %c0_i32_0 = arith.constant 0 : i32
    %c0_i32_1 = arith.constant 0 : i32
    return %arg1, %c0_i32, %c0_i32_0 : i32, i32, i32
  }
  func.func @transform_3(%arg0: i32, %arg1: i32, %arg2: i32) -> (i32, i32, i32, i32) {
    %c0_i32 = arith.constant 0 : i32
    %c0_i32_0 = arith.constant 0 : i32
    return %arg0, %arg1, %arg2, %c0_i32 : i32, i32, i32, i32
  }
}

</mosaic_0001>

<llo_original>
// kernel: tpu_custom_call.1
$region0: #{tpu_custom_call.1}
  #allocation0 [shape = 'u32[]', space=smem, size = 0x4, offset = 0x4, fixed_abs, tag = 'smem constant byte address 0x4 - core index']
  #allocation1 [shape = 'u32[72,128]{1,0:T(1,128)}', space=vmem, size = 0x9000, scoped, tag = 'internal scratch']
  #allocation2 [shape = 'bf16[8,8]{1,0:T(8,128)(2,1)}', space=vmem, size = 0x800, scoped, tag = 'scratch operand']
  #allocation3 [shape = 'bf16[8,8]{1,0:T(8,128)(2,1)}', space=vmem, size = 0x800, scoped, tag = 'scratch operand']
  %s0 = inlined_call_operand.vmem [shape: bf16[2,8,32], index: 0, kind: input, shape index: {}]
  %s1 = inlined_call_operand.vmem [shape: bf16[4,32,16], index: 1, kind: input, shape index: {}]
  %s2 = inlined_call_operand.vmem [shape: f32[4,1,16], index: 2, kind: input, shape index: {}]
  %s3 = inlined_call_operand.hbm [shape: f32[2,4,8,8], index: 3, kind: output, shape index: {}]
  %s4 = sld [smem:[#allocation0]]
  $region49: #{tpu_custom_call.1} parent=0
    _
  %s6 = ssub.s32 1, %s4
  %s7 = scalar_select 0, %s6, %s4
  $region1: #{tpu_custom_call.1} parent=0
    #allocation4 [shape = 'u8[8192]{0}', space=vmem, size = 0x2000, scoped, tag = 'output window, operand 0']
    #allocation5 [shape = 's32[2]{0}', space=sflag, size = 0x8, scoped, tag = 'scoped memory for tpu_custom_call.1']
    %8 = vsyncpa [#allocation5], 0
    %s9 = scalar_lea.sflag [#allocation5], 1
    %10 = vsyncpa %s9, 0
    loop: start=0, step=1, limit=10
    $region2: #{tpu_custom_call.1} parent=1 // loop_pre_header
      _
    $region3: #{tpu_custom_call.1} parent=1 // loop_header
      %s12 = sphi 0, %s16
      %p13 = scmp.ge.s32.totalorder %s12, 10
      %s19 = sphi 0, %s38
      %s20 = sphi 0, %s34
      %s21 = sphi 0, %s30
      %s22 = sphi 0, %s19
      %s23 = sphi 0, %s20
      %s24 = sphi 0, %s21
      %s25 = sphi 0, %s22
      %s26 = sphi 0, %s23
      %s27 = sphi 0, %s24
      %s41 = sphi 0, %s43
      %s44 = sphi 0, %s41
      %s45 = sphi 0, %s44
      %s61 = sphi 0, %s45
      %s67 = sphi 0, %s69
      %s70 = sphi 0, %s67
      %s71 = sphi 0, %s70
      %s87 = sphi 0, %s71
      %s93 = sphi 0, %s95
      %s96 = sphi 0, %s93
      %s97 = sphi 0, %s96
      %s113 = sphi 0, %s97
      %s123 = sphi 0, %s125
      %s126 = sphi 0, %s123
      %s127 = sphi 0, %s126
      %s143 = sphi 0, %s127
    $region4: #{tpu_custom_call.1} parent=1 // loop_header_branch
      %15 = sbr.rel (%p13) target = $region8
    $region5: #{tpu_custom_call.1} parent=1 // loop_body
      %s17 = ssub.s32 %s12, 1
      %s18 = ssub.s32 %s12, 2
      %s28 = sadd.s32 1, %s21
      %p29 = scmp.ge.s32.totalorder %s28, 1
      %s30 = scalar_select %p29, 0, %s28
      %s31 = sadd.s32 1, %s20
      %s32 = scalar_select %p29, %s31, %s20
      %p33 = scmp.ge.s32.totalorder %s32, 4
      %s34 = scalar_select %p33, 0, %s32
      %s35 = sadd.s32 1, %s19
      %s36 = scalar_select %p33, %s35, %s19
      %p37 = scmp.ge.s32.totalorder %s36, 2
      %s38 = scalar_select %p37, 0, %s36
      %s39 = ssub.s32 %s19, %s38
      %p40 = scmp.eq.s32.totalorder %s39, 0
      %s42 = sadd.s32 %s41, 1
      %s43 = scalar_select %p40, %s41, %s42
      %p46 = pneg %p40
      %p47 = scmp.eq.s32.totalorder %s12, 7
      %p48 = por %p46, %p47
      %p49 = scmp.ne.s32.totalorder %s41, %s44
      %p50 = scmp.eq.s32.totalorder %s12, 0
      %p51 = por %p49, %p50
      %p52 = scmp.ne.s32.totalorder %s41, %s44
      %p53 = scmp.eq.s32.totalorder %s17, 7
      %p54 = por %p52, %p53
      %p55 = scmp.ne.s32.totalorder %s44, %s45
      %p56 = scmp.eq.s32.totalorder %s17, 0
      %p57 = por %p55, %p56
      %p58 = scmp.ne.s32.totalorder %s44, %s45
      %p59 = scmp.eq.s32.totalorder %s18, 7
      %p60 = por %p58, %p59
      %p62 = scmp.ne.s32.totalorder %s45, %s61
      %p63 = scmp.eq.s32.totalorder %s18, 0
      %p64 = por %p62, %p63
      %s65 = ssub.s32 %s20, %s34
      %p66 = scmp.eq.s32.totalorder %s65, 0
      %s68 = sadd.s32 %s67, 1
      %s69 = scalar_select %p66, %s67, %s68
      %p72 = pneg %p66
      %p73 = scmp.eq.s32.totalorder %s12, 7
      %p74 = por %p72, %p73
      %p75 = scmp.ne.s32.totalorder %s67, %s70
      %p76 = scmp.eq.s32.totalorder %s12, 0
      %p77 = por %p75, %p76
      %p78 = scmp.ne.s32.totalorder %s67, %s70
      %p79 = scmp.eq.s32.totalorder %s17, 7
      %p80 = por %p78, %p79
      %p81 = scmp.ne.s32.totalorder %s70, %s71
      %p82 = scmp.eq.s32.totalorder %s17, 0
      %p83 = por %p81, %p82
      %p84 = scmp.ne.s32.totalorder %s70, %s71
      %p85 = scmp.eq.s32.totalorder %s18, 7
      %p86 = por %p84, %p85
      %p88 = scmp.ne.s32.totalorder %s71, %s87
      %p89 = scmp.eq.s32.totalorder %s18, 0
      %p90 = por %p88, %p89
      %s91 = ssub.s32 %s20, %s34
      %p92 = scmp.eq.s32.totalorder %s91, 0
      %s94 = sadd.s32 %s93, 1
      %s95 = scalar_select %p92, %s93, %s94
      %p98 = pneg %p92
      %p99 = scmp.eq.s32.totalorder %s12, 7
      %p100 = por %p98, %p99
      %p101 = scmp.ne.s32.totalorder %s93, %s96
      %p102 = scmp.eq.s32.totalorder %s12, 0
      %p103 = por %p101, %p102
      %p104 = scmp.ne.s32.totalorder %s93, %s96
      %p105 = scmp.eq.s32.totalorder %s17, 7
      %p106 = por %p104, %p105
      %p107 = scmp.ne.s32.totalorder %s96, %s97
      %p108 = scmp.eq.s32.totalorder %s17, 0
      %p109 = por %p107, %p108
      %p110 = scmp.ne.s32.totalorder %s96, %s97
      %p111 = scmp.eq.s32.totalorder %s18, 7
      %p112 = por %p110, %p111
      %p114 = scmp.ne.s32.totalorder %s97, %s113
      %p115 = scmp.eq.s32.totalorder %s18, 0
      %p116 = por %p114, %p115
      %s117 = ssub.s32 %s19, %s38
      %s118 = ssub.s32 %s20, %s34
      %s119 = sor.u32 %s117, %s118
      %s120 = ssub.s32 %s21, %s30
      %s121 = sor.u32 %s119, %s120
      %p122 = scmp.eq.s32.totalorder %s121, 0
      %s124 = sadd.s32 %s123, 1
      %s125 = scalar_select %p122, %s123, %s124
      %p128 = pneg %p122
      %p129 = scmp.eq.s32.totalorder %s12, 7
      %p130 = por %p128, %p129
      %p131 = scmp.ne.s32.totalorder %s123, %s126
      %p132 = scmp.eq.s32.totalorder %s12, 0
      %p133 = por %p131, %p132
      %p134 = scmp.ne.s32.totalorder %s123, %s126
      %p135 = scmp.eq.s32.totalorder %s17, 7
      %p136 = por %p134, %p135
      %p137 = scmp.ne.s32.totalorder %s126, %s127
      %p138 = scmp.eq.s32.totalorder %s17, 0
      %p139 = por %p137, %p138
      %p140 = scmp.ne.s32.totalorder %s126, %s127
      %p141 = scmp.eq.s32.totalorder %s18, 7
      %p142 = por %p140, %p141
      %p144 = scmp.ne.s32.totalorder %s127, %s143
      %p145 = scmp.eq.s32.totalorder %s18, 0
      %p146 = por %p144, %p145
      %p147 = scmp.le.s32.totalorder 1, %s12
      %p148 = scmp.lt.s32.totalorder %s12, 9
      %p149 = pnand %p147, %p148
      %p150 = pneg %p149
      // Predicated region
      $region9: #{tpu_custom_call.1} parent=5 // pred_check
        _
      $region10: #{tpu_custom_call.1} parent=5 // pred_check_branch
        %152 = sbr.rel (%p149) target = $region12
      $region11: #{tpu_custom_call.1} parent=5 // pred_region
        %s153 = ssub.s32 %s12, 1
      $region12: #{tpu_custom_call.1} parent=5 // pred_fallthru
        _
      %p154 = scmp.lt.s32.totalorder %s12, 8
      // Predicated region
      $region13: #{tpu_custom_call.1} parent=5 // pred_check
        %p155 = pneg %p154
      $region14: #{tpu_custom_call.1} parent=5 // pred_check_branch
        %157 = sbr.rel (%p155) target = $region16
      $region15: #{tpu_custom_call.1} parent=5 // pred_region
        // Predicated region
        $region17: #{tpu_custom_call.1} parent=15 // pred_check
          %p158 = pneg %p51
        $region18: #{tpu_custom_call.1} parent=15 // pred_check_branch
          %160 = sbr.rel (%p158) target = $region20
        $region19: #{tpu_custom_call.1} parent=15 // pred_region
          %p161 = scmp.lt.s32.totalorder %s19, 1
          %s162 = scalar_select %p161, %s19, 1
          %s163 = smul.addr %s162, 4
          %s164 = scalar_lea.vmem %s0, %s163
        $region20: #{tpu_custom_call.1} parent=15 // pred_fallthru
          _
        // Predicated region
        $region21: #{tpu_custom_call.1} parent=15 // pred_check
          %p165 = pneg %p77
        $region22: #{tpu_custom_call.1} parent=15 // pred_check_branch
          %167 = sbr.rel (%p165) target = $region24
        $region23: #{tpu_custom_call.1} parent=15 // pred_region
          %p168 = scmp.lt.s32.totalorder %s20, 3
          %s169 = scalar_select %p168, %s20, 3
          %s170 = smul.addr %s169, 4
          %s171 = smul.addr %s170, 4
          %s172 = scalar_lea.vmem %s1, %s171
        $region24: #{tpu_custom_call.1} parent=15 // pred_fallthru
          _
        // Predicated region
        $region25: #{tpu_custom_call.1} parent=15 // pred_check
          %p173 = pneg %p103
        $region26: #{tpu_custom_call.1} parent=15 // pred_check_branch
          %175 = sbr.rel (%p173) target = $region28
        $region27: #{tpu_custom_call.1} parent=15 // pred_region
          %p176 = scmp.lt.s32.totalorder %s20, 3
          %s177 = scalar_select %p176, %s20, 3
          %s178 = scalar_lea.vmem %s2, %s177
        $region28: #{tpu_custom_call.1} parent=15 // pred_fallthru
          _
      $region16: #{tpu_custom_call.1} parent=5 // pred_fallthru
        _
      %p179 = scmp.le.s32.totalorder 1, %s12
      %p180 = scmp.lt.s32.totalorder %s12, 9
      %p181 = pnand %p179, %p180
      %p182 = pneg %p181
      // Predicated region
      $region29: #{tpu_custom_call.1} parent=5 // pred_check
        _
      $region30: #{tpu_custom_call.1} parent=5 // pred_check_branch
        %184 = sbr.rel (%p181) target = $region32
      $region31: #{tpu_custom_call.1} parent=5 // pred_region
        %s185 = ssub.s32 %s12, 1
        %p186 = scmp.lt.s32.totalorder %s22, 1
        %s187 = scalar_select %p186, %s22, 1
        %s188 = smul.addr %s187, 4
        %s189 = scalar_lea.vmem %s0, %s188
        %p190 = pneg %p57
        %p191 = pneg %p54
        %p192 = scmp.lt.s32.totalorder %s23, 3
        %s193 = scalar_select %p192, %s23, 3
        %s194 = smul.addr %s193, 4
        %s195 = smul.addr %s194, 4
        %s196 = scalar_lea.vmem %s1, %s195
        %p197 = pneg %p83
        %p198 = pneg %p80
        %p199 = scmp.lt.s32.totalorder %s23, 3
        %s200 = scalar_select %p199, %s23, 3
        %s201 = scalar_lea.vmem %s2, %s200
        %p202 = pneg %p109
        %p203 = pneg %p106
        %p204 = pneg %p139
        %p205 = pneg %p136
        %s206 = sand.u32 %s126, 1
        %s207 = scalar_lea.sflag [#allocation5], %s206
        %s208 = sand.u32 %s126, 1
        %s209 = smul.addr %s208, 8
        %s210 = scalar_lea.vmem [#allocation4], %s209
        %p211 = scmp.lt.s32.totalorder %s22, 1
        %s212 = scalar_select %p211, %s22, 1
        %s213 = smul.addr %s212, 4
        %s214 = scalar_lea.vmem %s0, %s213
        %p215 = scmp.lt.s32.totalorder %s23, 3
        %s216 = scalar_select %p215, %s23, 3
        %s217 = smul.addr %s216, 4
        %s218 = smul.addr %s217, 4
        %s219 = scalar_lea.vmem %s1, %s218
        %p220 = scmp.lt.s32.totalorder %s23, 3
        %s221 = scalar_select %p220, %s23, 3
        %s222 = scalar_lea.vmem %s2, %s221
        %p224 = scmp.eq.s32.totalorder %s24, 0
        // Predicated region
        $region33: #{tpu_custom_call.1} parent=31 // pred_check
          %p225 = pneg %p224
        $region34: #{tpu_custom_call.1} parent=31 // pred_check_branch
          %227 = sbr.rel (%p225) target = $region36
        $region35: #{tpu_custom_call.1} parent=31 // pred_region
          %v228 = vld [vmem:[%s214] sm:$0xf]
          %v229 = vld [vmem:[%s219] sm:$0xf]
          %v230 = vld [vmem:[%s219 + $0x4] sm:$0xf]
          %v231 = vld [vmem:[%s219 + $0x8] sm:$0xf]
          %v232 = vld [vmem:[%s219 + $0xc] sm:$0xf]
          %v233 = vld [vmem:[%s222] sm:$0x1]
          %v235 = vperm.slane %v233, 0
          %v241 = vunpack.c.l.b16 %v229
          %v242 = vunpack.c.l.b16 %v230
          %v243 = vunpack.c.l.b16 %v231
          %v244 = vunpack.c.l.b16 %v232
          %v245 = vpack.c.b16 %v242, %v241
          %v246 = vpack.c.b16 %v244, %v243
          %vm249 = vcmask 261120
          %v251 = vsel %vm249, %v228, 0
          %253 = vmatpush.bf16.msra.mxu0 0
          %254 = vmatpush.bf16.msra.mxu0 0
          %255 = vmatpush.bf16.msra.mxu0 0
          %256 = vmatpush.bf16.msra.mxu0 0
          %257 = vmatpush.bf16.msra.mxu0 0
          %258 = vmatpush.bf16.msra.mxu0 0
          %259 = vmatpush.bf16.msra.mxu0 %v246
          %260 = vmatpush.bf16.msra.mxu0 %v245
          %261 = vmatmul.bf16.gmra.mxu0 %v251
          %v262 = vpop.f32.mrf.mxu0
          %v263 = vadd.f32 %v235, %v262
          %v264 = vpop.f32.mrf.mxu0
          %265 = vdwg.mxu0
          %v266 = vpack.c.bf16 %v263, %v263
          %vm267 = vcmask 60416
          %268 = vst.msk [vmem:[#allocation2] sm:$0xf] %vm267, %v266
          %270 = vrot.lane.b32.xlu0 %v266, 120
          %v271 = vpop.permute.xlu0 %270
          %273 = vst.msk [vmem:[#allocation3] sm:$0xf] %vm267, %v271
        $region36: #{tpu_custom_call.1} parent=31 // pred_fallthru
          _
        %s274 = smul.u32 %s24, 8
        %s275 = sshra.s32 %s274, 3
        %s276 = sand.u32 %s274, 7
        %s277 = smul.addr %s275, 4
        %s278 = scalar_lea.vmem [#allocation2], %s277
        %v279 = vld [vmem:[%s278] sm:$0xf]
        %v280 = vld [vmem:[#allocation3] sm:$0xf]
        %vm281 = vcmask 64512
        %v283 = vsel %vm281, %v279, 0
        %v286 = vsel %vm281, %v280, 0
        %288 = vmatpush.bf16.xpose.msra.mxu0 0
        %289 = vmatpush.bf16.xpose.msra.mxu0 0
        %290 = vmatpush.bf16.xpose.msra.mxu0 0
        %291 = vmatpush.bf16.xpose.msra.mxu0 0
        %292 = vmatpush.bf16.xpose.msra.mxu0 0
        %293 = vmatpush.bf16.xpose.msra.mxu0 0
        %294 = vmatpush.bf16.xpose.msra.mxu0 0
        %295 = vmatpush.bf16.xpose.msra.mxu0 %v286
        %296 = vmatmul.bf16.gmra.mxu0 %v283
        %v297 = vpop.f32.mrf.mxu0
        %v298 = vadd.f32 0.0, %v297
        %v299 = vpop.f32.mrf.mxu0
        %300 = vdwg.mxu0
        %v301 = vlaneseq
        %v302 = vshrl.u32 %v301, 7
        %v303 = vstv %s274
        %v304 = vadd.s32 %v303, %v302
        %v305 = vlaneseq
        %v306 = vand.u32 %v305, 127
        %vm307 = vcmp.gt.s32.totalorder %v306, %v304
        %v308 = vsub.f32 %v298, 10000.0
        %v309 = vsel %vm307, %v308, %v298
        %v310 = vsel %vm281, %v309, -inf
        %311 = vmax.xlane.f32.xlu0 %v310
        %v312 = vpop.xlane.xlu0 %311
        %v313 = vsub.f32 %v309, %v312
        %v314 = vmul.f32 %v313, 1.442695
        %v315 = vpow.pop %v314
        %v316 = vsel %vm281, %v315, 0.0
        %317 = vadd.xlane.f32.xlu0 %v316
        %v318 = vpop.xlane.xlu0 %317
        %v319 = vrcp.pop %v318
        %v320 = vmul.f32 %v315, %v319
        %321 = vst.msk [vmem:[%s210] sm:$0xff] %vm281, %v320
        %s322 = sand.u32 %s126, 1
        %s323 = scalar_lea.sflag [#allocation5], %s322
        %s324 = sand.u32 %s126, 1
        %s325 = smul.addr %s324, 8
        %s326 = scalar_lea.vmem [#allocation4], %s325
        // Predicated region
        $region37: #{tpu_custom_call.1} parent=31 // pred_check
          %p327 = pneg %p136
        $region38: #{tpu_custom_call.1} parent=31 // pred_check_branch
          %329 = sbr.rel (%p327) target = $region40
        $region39: #{tpu_custom_call.1} parent=31 // pred_region
          %331 = vsyncadd %s323, 0
          %s332 = sadd.s32 %s24, %s23
          %s333 = smul.addr %s22, 4
          %s334 = sadd.s32 %s332, %s333
          %s335 = smul.addr %s334, 8
          %s336 = scalar_lea.hbm %s3, %s335
          %s338 = sshll.u32 %s326, 4
          %s339 = int_to_ptr.vmem [resolvable:$true] %s338
          %s340 = sshll.u32 %s336, 4
          %s341 = int_to_ptr.hbm [resolvable:$true] %s340
          %343 = dma.vmem_to_hbm [thread:$0]  %s339, 128, %s341, %s323
        $region40: #{tpu_custom_call.1} parent=31 // pred_fallthru
          _
      $region32: #{tpu_custom_call.1} parent=5 // pred_fallthru
        _
      %p344 = scmp.le.s32.totalorder 2, %s12
      // Predicated region
      $region41: #{tpu_custom_call.1} parent=5 // pred_check
        %p345 = pneg %p344
      $region42: #{tpu_custom_call.1} parent=5 // pred_check_branch
        %347 = sbr.rel (%p345) target = $region44
      $region43: #{tpu_custom_call.1} parent=5 // pred_region
        %s348 = ssub.s32 %s12, 2
        // Predicated region
        $region45: #{tpu_custom_call.1} parent=43 // pred_check
          %p349 = pneg %p142
        $region46: #{tpu_custom_call.1} parent=43 // pred_check_branch
          %351 = sbr.rel (%p349) target = $region48
        $region47: #{tpu_custom_call.1} parent=43 // pred_region
          %s352 = sand.u32 %s127, 1
          %s353 = scalar_lea.sflag [#allocation5], %s352
          %s354 = sand.u32 %s127, 1
          %s355 = smul.addr %s354, 8
          %s356 = scalar_lea.vmem [#allocation4], %s355
          %358 = dma.done %s353, 128
        $region48: #{tpu_custom_call.1} parent=43 // pred_fallthru
          _
      $region44: #{tpu_custom_call.1} parent=5 // pred_fallthru
        _
    $region6: #{tpu_custom_call.1} parent=1 // loop_footer
      %s16 = sadd.s32 1, %s12
    $region7: #{tpu_custom_call.1} parent=1 // loop_footer_branch
      %11 = sbr.rel target = $region3
    $region8: #{tpu_custom_call.1} parent=1 // loop_exit
      _
    %359 = vsyncpa [#allocation5], 1
    %s360 = scalar_lea.sflag [#allocation5], 1
    %361 = vsyncpa %s360, 1

</llo_original>
